<compile_context>
chip_gen: v5e
topology: v5e:2x2
jax: 0.10.0
libtpu: 0.0.40
codegen_flags: <defaults>
</compile_context>

<pallas_src>
import functools

import jax
import jax.numpy as jnp
from jax import lax
from jax.experimental import pallas as pl
from jax.experimental.pallas import tpu as pltpu


def _round_up(a, b):
    return (a + b - 1) // b * b


def _physical_vmem_bytes():
    """Physical VMEM per TensorCore; conservative (v7x-sized) fallback if unqueryable."""
    try:
        return int(pltpu.get_tpu_info().vmem_capacity_bytes)
    except Exception:
        return 64 * 1024 * 1024


def _exp_dtype():
    """bf16 exp on v6e/v7x (bf16 EUP, ~2x throughput, no extra cast); f32 on v5e/older."""
    try:
        kind = jax.devices()[0].device_kind.lower()
    except Exception:
        return jnp.float32
    if ("v6" in kind) or ("v7" in kind) or ("7x" in kind):
        return jnp.bfloat16
    return jnp.float32


def _vmem_estimate(C, Cq, Np, tq):
    """Rough per-step VMEM bytes (double-buffered blocks + softmax temporaries)."""
    def padded_rows(rows, itemsize):
        mult = 32 // itemsize                       # sublane tiling: 8 (f32) / 16 (bf16)
        return _round_up(max(rows, 1), mult)
    bf, f32 = 2, 4
    blocks = (2 * padded_rows(Cq + 1, bf) * tq * bf      # q tile (+ ones row)
              + 2 * padded_rows(Cq + 1, bf) * Np * bf    # K (+ mask row), per-batch resident
              + 2 * padded_rows(C + 1, bf) * Np * bf     # V (+ ones row), per-batch resident
              + 2 * padded_rows(C, f32) * tq * f32       # x residual tile
              + 2 * padded_rows(C, f32) * tq * f32)      # output tile
    temps = Np * tq * (2 * f32 + bf)                     # scores, shifted scores, exp
    return blocks + temps + (2 << 20)                    # headroom


def _attention_kernel(gamma_ref,   # SMEM (1,) f32
                      q_ref,       # VMEM (1, Cq+1, tq) bf16   (last row == ones)
                      k_ref,       # VMEM (1, Cq+1, Np) bf16   (last row == key-mask bias)
                      v_ref,       # VMEM (1, C+1,  Np) bf16   (last row == ones)
                      x_ref,       # VMEM (1, C,    tq) f32    (residual tile)
                      o_ref,       # VMEM (1, C,    tq) f32
                      *, exp_dtype):
    # Flipped layout: keys on sublanes, queries on lanes.
    q = q_ref[0]                                                     # (Cq+1, tq)
    k = k_ref[0]                                                     # (Cq+1, Np)
    # scores^T via one lhs-transposed MXU matmul; the padded-key -1e30 bias rides in the
    # extra (ones x mask) contraction row, so no per-tile iota/compare/select pass.
    att_t = lax.dot_general(k, q, dimension_numbers=(((0,), (0,)), ((), ())),
                            preferred_element_type=jnp.float32)      # (Np, tq) f32
    m = jnp.max(att_t, axis=0, keepdims=True)                        # (1, tq) sublane reduce
    e = jnp.exp((att_t - m).astype(exp_dtype)).astype(jnp.bfloat16)  # (Np, tq) bf16
    # V is augmented with a ones row: a single MXU matmul yields the numerator (first C
    # rows) and the softmax denominator (last row), both accumulated in f32.
    out_aug = jnp.dot(v_ref[0], e, preferred_element_type=jnp.float32)   # (C+1, tq) f32
    inv = pl.reciprocal(out_aug[-1:, :], approx=True)                    # (1, tq)
    o_ref[0] = gamma_ref[0] * (out_aug[:-1, :] * inv) + x_ref[0]         # lane-dense (C, tq)


def self_attention_pallas(x_bchw, wq, bq, wk, bk, wv, bv, gamma, *, tq=None):
    """x_bchw: (B, C, H, W) f32. wq/wk: (Cq, C), wv: (C, C), biases (out,), gamma scalar."""
    B, C, H, W = map(int, x_bchw.shape)
    N = H * W
    Cq = int(wq.shape[0])

    # ---- 1x1-conv projections hoisted out of the attention grid (plain XLA matmuls) ----
    x_flat = x_bchw.reshape(B, C, N).astype(jnp.float32)
    q = jnp.einsum('oc,bcn->bon', wq.astype(jnp.float32), x_flat) + bq.astype(jnp.float32)[None, :, None]
    k = jnp.einsum('oc,bcn->bon', wk.astype(jnp.float32), x_flat) + bk.astype(jnp.float32)[None, :, None]
    v = jnp.einsum('oc,bcn->bon', wv.astype(jnp.float32), x_flat) + bv.astype(jnp.float32)[None, :, None]

    # ---- generation-aware tile / VMEM budget ----
    exp_dtype = _exp_dtype()
    phys = _physical_vmem_bytes()
    cap = min(phys * 3 // 4, 96 * 1024 * 1024)           # ~48 MiB on v7x, 96 MiB on v5e/v6e
    tq = 256 if tq is None else max(128, int(tq))
    tq = _round_up(tq, 128)
    tq = min(tq, _round_up(N, 128))                      # don't over-pad tiny N
    while tq > 128 and _vmem_estimate(C, Cq, _round_up(N, tq), tq) > cap:
        tq //= 2
    Np = _round_up(N, tq)
    n_q = Np // tq
    vmem_limit = int(min(cap, max(3 * _vmem_estimate(C, Cq, Np, tq) // 2, 32 * 1024 * 1024)))

    pad = Np - N
    if pad:
        x_flat = jnp.pad(x_flat, ((0, 0), (0, 0), (0, pad)))
        q = jnp.pad(q, ((0, 0), (0, 0), (0, pad)))
        k = jnp.pad(k, ((0, 0), (0, 0), (0, pad)))
        v = jnp.pad(v, ((0, 0), (0, 0), (0, pad)))

    # Fold the padded-key mask into the score matmul (extra ones row in q, 0/-1e30 row in K)
    # and the softmax denominator into the PV matmul (extra ones row in V).
    ones_row = jnp.ones((B, 1, Np), jnp.float32)
    mask_row = jnp.broadcast_to(
        jnp.where(jnp.arange(Np) < N, 0.0, -1e30).astype(jnp.float32)[None, None, :],
        (B, 1, Np))
    q_aug = jnp.concatenate([q, ones_row], axis=1).astype(jnp.bfloat16)   # (B, Cq+1, Np)
    k_aug = jnp.concatenate([k, mask_row], axis=1).astype(jnp.bfloat16)   # (B, Cq+1, Np)
    v_aug = jnp.concatenate([v, ones_row], axis=1).astype(jnp.bfloat16)   # (B, C+1,  Np)

    gamma1 = jnp.asarray(gamma, jnp.float32).reshape(1)

    kernel = functools.partial(_attention_kernel, exp_dtype=exp_dtype)

    out_flat = pl.pallas_call(
        kernel,
        out_shape=jax.ShapeDtypeStruct((B, C, Np), jnp.float32),
        grid=(B, n_q),
        in_specs=[
            pl.BlockSpec(memory_space=pltpu.MemorySpace.SMEM),              # gamma
            pl.BlockSpec((1, Cq + 1, tq), lambda b, qi: (b, 0, qi)),        # q tile
            pl.BlockSpec((1, Cq + 1, Np), lambda b, qi: (b, 0, 0)),         # K (per-batch)
            pl.BlockSpec((1, C + 1, Np), lambda b, qi: (b, 0, 0)),          # V+ones (per-batch)
            pl.BlockSpec((1, C, tq), lambda b, qi: (b, 0, qi)),             # x residual tile
        ],
        out_specs=pl.BlockSpec((1, C, tq), lambda b, qi: (b, 0, qi)),
        compiler_params=pltpu.CompilerParams(
            dimension_semantics=("parallel", "parallel"),
            vmem_limit_bytes=vmem_limit),
    )(gamma1, q_aug, k_aug, v_aug, x_flat)

    if pad:
        out_flat = out_flat[:, :, :N]
    return out_flat.reshape(B, C, H, W)


def _reference(x_bchw, wq, bq, wk, bk, wv, bv, gamma):
    """Pure-JAX reference mirroring the PyTorch forward."""
    B, C, H, W = x_bchw.shape
    N = H * W
    x = x_bchw.reshape(B, C, N)
    q = jnp.einsum('oc,bcn->bon', wq, x) + bq[None, :, None]
    k = jnp.einsum('oc,bcn->bon', wk, x) + bk[None, :, None]
    v = jnp.einsum('oc,bcn->bon', wv, x) + bv[None, :, None]
    att = jax.nn.softmax(jnp.einsum('bqn,bqm->bnm', q, k), axis=-1)   # (B, N, N)
    out = jnp.einsum('bcn,bmn->bcm', v, att)                          # v @ att^T
    return (gamma * out + x).reshape(B, C, H, W)


def _xavier_uniform(key, shape_out_in):
    fan_out, fan_in = shape_out_in
    bound = (6.0 / (fan_in + fan_out)) ** 0.5
    return jax.random.uniform(key, shape_out_in, jnp.float32, -bound, bound)


if __name__ == "__main__":
    # Module hyperparams: in_channels=4 -> query_channels = max(4 // 8, 1) = 1
    B, C, H, W = 2, 4, 16, 16
    Cq = max(C // 8, 1)

    key = jax.random.PRNGKey(0)
    kx, kq, kk, kv, kbq, kbk, kbv = jax.random.split(key, 7)

    x = jax.random.normal(kx, (B, C, H, W), jnp.float32)
    wq = _xavier_uniform(kq, (Cq, C))
    wk = _xavier_uniform(kk, (Cq, C))
    wv = _xavier_uniform(kv, (C, C))
    b_bound = 1.0 / (C ** 0.5)
    bq = jax.random.uniform(kbq, (Cq,), jnp.float32, -b_bound, b_bound)
    bk = jax.random.uniform(kbk, (Cq,), jnp.float32, -b_bound, b_bound)
    bv = jax.random.uniform(kbv, (C,), jnp.float32, -b_bound, b_bound)

    # 1) module-init gamma (=0): residual/output plumbing must match exactly.
    gamma0 = jnp.zeros((), jnp.float32)
    out0 = jax.block_until_ready(self_attention_pallas(x, wq, bq, wk, bk, wv, bv, gamma0))
    ref0 = _reference(x, wq, bq, wk, bk, wv, bv, gamma0)
    assert jnp.allclose(out0, ref0, atol=1e-6, rtol=1e-6), "gamma=0 mismatch"

    # 2) non-zero gamma: full attention path (bf16 MXU operands -> relaxed tolerance).
    gamma = jnp.asarray(0.7, jnp.float32)
    out = jax.block_until_ready(self_attention_pallas(x, wq, bq, wk, bk, wv, bv, gamma))
    ref = _reference(x, wq, bq, wk, bk, wv, bv, gamma)
    assert jnp.allclose(out, ref, atol=5e-2, rtol=5e-2), \
        f"gamma!=0 mismatch, max abs err={float(jnp.max(jnp.abs(out - ref)))}"

    # 3) non-multiple-of-128 spatial size exercises N padding + folded key masking.
    B2, C2, H2, W2 = 1, 8, 10, 10
    Cq2 = max(C2 // 8, 1)
    ks = jax.random.split(key, 8)
    x2 = jax.random.normal(ks[0], (B2, C2, H2, W2), jnp.float32)
    wq2 = _xavier_uniform(ks[1], (Cq2, C2))
    wk2 = _xavier_uniform(ks[2], (Cq2, C2))
    wv2 = _xavier_uniform(ks[3], (C2, C2))
    bb2 = 1.0 / (C2 ** 0.5)
    bq2 = jax.random.uniform(ks[4], (Cq2,), jnp.float32, -bb2, bb2)
    bk2 = jax.random.uniform(ks[5], (Cq2,), jnp.float32, -bb2, bb2)
    bv2 = jax.random.uniform(ks[6], (C2,), jnp.float32, -bb2, bb2)
    out2 = jax.block_until_ready(
        self_attention_pallas(x2, wq2, bq2, wk2, bk2, wv2, bv2, gamma))
    ref2 = _reference(x2, wq2, bq2, wk2, bk2, wv2, bv2, gamma)
    assert jnp.allclose(out2, ref2, atol=5e-2, rtol=5e-2), \
        f"padded case mismatch, max abs err={float(jnp.max(jnp.abs(out2 - ref2)))}"

    print("KERNEL_OK")
</pallas_src>

<mosaic_0001>
module attributes {stable_mosaic.version = 11 : i64} {
  func.func @_attention_kernel(%arg0: i32, %arg1: i32, %arg2: memref<1xf32, #tpu.memory_space<smem>>, %arg3: memref<1x2x256xbf16, #tpu.memory_space<vmem>>, %arg4: memref<1x2x256xbf16, #tpu.memory_space<vmem>>, %arg5: memref<1x5x256xbf16, #tpu.memory_space<vmem>>, %arg6: memref<1x4x256xf32, #tpu.memory_space<vmem>>, %arg7: memref<1x4x256xf32, #tpu.memory_space<vmem>>) attributes {dimension_semantics = [#tpu.dimension_semantics<parallel>, #tpu.dimension_semantics<parallel>], iteration_bounds = array<i64: 2, 1>, scalar_prefetch = 0 : i64, scratch_operands = 0 : i64, tpu.core_type = #tpu.core_type<tc>, window_params = [{transform_indices = @transform_0, window_bounds = array<i64: 1>}, {transform_indices = @transform_1, window_bounds = array<i64: 1, 2, 256>}, {transform_indices = @transform_2, window_bounds = array<i64: 1, 2, 256>}, {transform_indices = @transform_3, window_bounds = array<i64: 1, 5, 256>}, {transform_indices = @transform_4, window_bounds = array<i64: 1, 4, 256>}, {transform_indices = @transform_5, window_bounds = array<i64: 1, 4, 256>}]} {
    %c0 = arith.constant 0 : index
    %c0_0 = arith.constant 0 : index
    %c0_1 = arith.constant 0 : index
    %0 = vector.load %arg3[%c0, %c0_0, %c0_1] : memref<1x2x256xbf16, #tpu.memory_space<vmem>>, vector<1x2x256xbf16>
    %1 = vector.shape_cast %0 : vector<1x2x256xbf16> to vector<2x256xbf16>
    %c0_2 = arith.constant 0 : index
    %c0_3 = arith.constant 0 : index
    %c0_4 = arith.constant 0 : index
    %2 = vector.load %arg4[%c0_2, %c0_3, %c0_4] : memref<1x2x256xbf16, #tpu.memory_space<vmem>>, vector<1x2x256xbf16>
    %3 = vector.shape_cast %2 : vector<1x2x256xbf16> to vector<2x256xbf16>
    %cst = arith.constant dense<0.000000e+00> : vector<256x256xf32>
    %4 = tpu.matmul %3, %1, %cst {dimension_numbers = #tpu.dot_dimension_numbers<[0], [0], [1], [1], [0, 1, 1, 1], [], []>} : vector<2x256xbf16>, vector<2x256xbf16>, vector<256x256xf32> -> vector<256x256xf32>
    %cst_5 = arith.constant dense<0xFF800000> : vector<256xf32>
    %5 = vector.multi_reduction <maximumf>, %4, %cst_5 [0] : vector<256x256xf32> to vector<256xf32>
    %6 = vector.shape_cast %5 : vector<256xf32> to vector<1x256xf32>
    %7 = vector.broadcast %6 : vector<1x256xf32> to vector<256x256xf32>
    %8 = arith.subf %4, %7 : vector<256x256xf32>
    %9 = math.exp %8 : vector<256x256xf32>
    %10 = arith.truncf %9 : vector<256x256xf32> to vector<256x256xbf16>
    %c0_6 = arith.constant 0 : index
    %c0_7 = arith.constant 0 : index
    %c0_8 = arith.constant 0 : index
    %11 = vector.load %arg5[%c0_6, %c0_7, %c0_8] : memref<1x5x256xbf16, #tpu.memory_space<vmem>>, vector<1x5x256xbf16>
    %12 = vector.shape_cast %11 : vector<1x5x256xbf16> to vector<5x256xbf16>
    %cst_9 = arith.constant dense<0.000000e+00> : vector<5x256xf32>
    %13 = tpu.matmul %12, %10, %cst_9 {dimension_numbers = #tpu.dot_dimension_numbers<[1], [0], [0], [1], [0, 0, 1, 1], [], []>} : vector<5x256xbf16>, vector<256x256xbf16>, vector<5x256xf32> -> vector<5x256xf32>
    %14 = vector.extract_strided_slice %13 {offsets = [4, 0], sizes = [1, 256], strides = [1, 1]} : vector<5x256xf32> to vector<1x256xf32>
    %15 = tpu.reciprocal %14 {approx = true} : vector<1x256xf32> -> vector<1x256xf32>
    %c0_10 = arith.constant 0 : index
    %16 = memref.load %arg2[%c0_10] : memref<1xf32, #tpu.memory_space<smem>>
    %17 = vector.extract_strided_slice %13 {offsets = [0, 0], sizes = [4, 256], strides = [1, 1]} : vector<5x256xf32> to vector<4x256xf32>
    %18 = vector.broadcast %15 : vector<1x256xf32> to vector<4x256xf32>
    %19 = arith.mulf %17, %18 : vector<4x256xf32>
    %20 = vector.broadcast %16 : f32 to vector<4x256xf32>
    %21 = arith.mulf %20, %19 : vector<4x256xf32>
    %c0_11 = arith.constant 0 : index
    %c0_12 = arith.constant 0 : index
    %c0_13 = arith.constant 0 : index
    %22 = vector.load %arg6[%c0_11, %c0_12, %c0_13] : memref<1x4x256xf32, #tpu.memory_space<vmem>>, vector<1x4x256xf32>
    %23 = vector.shape_cast %22 : vector<1x4x256xf32> to vector<4x256xf32>
    %24 = arith.addf %21, %23 : vector<4x256xf32>
    %c0_14 = arith.constant 0 : index
    %c0_15 = arith.constant 0 : index
    %c0_16 = arith.constant 0 : index
    %25 = vector.load %arg7[%c0_14, %c0_15, %c0_16] : memref<1x4x256xf32, #tpu.memory_space<vmem>>, vector<1x4x256xf32>
    %26 = vector.shape_cast %25 : vector<1x4x256xf32> to vector<4x256xf32>
    %27 = vector.shape_cast %24 : vector<4x256xf32> to vector<1x4x256xf32>
    tpu.vector_store %arg7[%c0_14, %c0_15, %c0_16], %27 {strides = array<i32>} : memref<1x4x256xf32, #tpu.memory_space<vmem>>, vector<1x4x256xf32>,
    return
  }
  func.func @transform_0(%arg0: i32, %arg1: i32) -> i32 {
    %c0_i32 = arith.constant 0 : i32
    %c0_i32_0 = arith.constant 0 : i32
    return %c0_i32 : i32
  }
  func.func @transform_1(%arg0: i32, %arg1: i32) -> (i32, i32, i32) {
    %c0_i32 = arith.constant 0 : i32
    %c0_i32_0 = arith.constant 0 : i32
    return %arg0, %c0_i32, %arg1 : i32, i32, i32
  }
  func.func @transform_2(%arg0: i32, %arg1: i32) -> (i32, i32, i32) {
    %c0_i32 = arith.constant 0 : i32
    %c0_i32_0 = arith.constant 0 : i32
    %c0_i32_1 = arith.constant 0 : i32
    return %arg0, %c0_i32, %c0_i32_0 : i32, i32, i32
  }
  func.func @transform_3(%arg0: i32, %arg1: i32) -> (i32, i32, i32) {
    %c0_i32 = arith.constant 0 : i32
    %c0_i32_0 = arith.constant 0 : i32
    %c0_i32_1 = arith.constant 0 : i32
    return %arg0, %c0_i32, %c0_i32_0 : i32, i32, i32
  }
  func.func @transform_4(%arg0: i32, %arg1: i32) -> (i32, i32, i32) {
    %c0_i32 = arith.constant 0 : i32
    %c0_i32_0 = arith.constant 0 : i32
    return %arg0, %c0_i32, %arg1 : i32, i32, i32
  }
  func.func @transform_5(%arg0: i32, %arg1: i32) -> (i32, i32, i32) {
    %c0_i32 = arith.constant 0 : i32
    %c0_i32_0 = arith.constant 0 : i32
    return %arg0, %c0_i32, %arg1 : i32, i32, i32
  }
}

</mosaic_0001>

<llo_original>
// kernel: tpu_custom_call.1
$region0: #{tpu_custom_call.1}
  #allocation0 [shape = 'u32[]', space=smem, size = 0x4, offset = 0x4, fixed_abs, tag = 'smem constant byte address 0x4 - core index']
  #allocation1 [shape = 'u32[72,128]{1,0:T(1,128)}', space=vmem, size = 0x9000, scoped, tag = 'internal scratch']
  #allocation2 [shape = 'f32[1]{0:T(128)S(6)}', space=smem, size = 0x200, scoped, tag = 'scoped memory for tpu_custom_call.1']
  %s0 = inlined_call_operand.<no memory space> [shape: f32[1], index: 0, kind: input, shape index: {}]
  %s1 = inlined_call_operand.vmem [shape: bf16[2,2,256], index: 1, kind: input, shape index: {}]
  %s2 = inlined_call_operand.vmem [shape: bf16[2,2,256], index: 2, kind: input, shape index: {}]
  %s3 = inlined_call_operand.vmem [shape: bf16[2,5,256], index: 3, kind: input, shape index: {}]
  %s4 = inlined_call_operand.vmem [shape: f32[2,4,256], index: 4, kind: input, shape index: {}]
  %s5 = inlined_call_operand.hbm [shape: f32[2,4,256], index: 5, kind: output, shape index: {}]
  %s6 = sld [smem:[#allocation0]]
  $region53: #{tpu_custom_call.1} parent=0
    _
  %s8 = ssub.s32 1, %s6
  %s9 = scalar_select 0, %s8, %s6
  %10 = sst [smem:[#allocation2]] %s0
  $region1: #{tpu_custom_call.1} parent=0
    #allocation3 [shape = 'u8[8192]{0}', space=vmem, size = 0x2000, scoped, tag = 'output window, operand 0']
    #allocation4 [shape = 's32[2]{0}', space=sflag, size = 0x8, scoped, tag = 'scoped memory for tpu_custom_call.1']
    %11 = vsyncpa [#allocation4], 0
    %s12 = scalar_lea.sflag [#allocation4], 1
    %13 = vsyncpa %s12, 0
    loop: start=0, step=1, limit=4
    $region2: #{tpu_custom_call.1} parent=1 // loop_pre_header
      _
    $region3: #{tpu_custom_call.1} parent=1 // loop_header
      %s15 = sphi 0, %s19
      %p16 = scmp.ge.s32.totalorder %s15, 4
      %s22 = sphi 0, %s34
      %s23 = sphi 0, %s30
      %s24 = sphi 0, %s22
      %s25 = sphi 0, %s23
      %s26 = sphi 0, %s24
      %s27 = sphi 0, %s25
      %s35 = sphi 0, %s35
      %s37 = sphi 0, %s35
      %s38 = sphi 0, %s37
      %s52 = sphi 0, %s38
      %s60 = sphi 0, %s62
      %s63 = sphi 0, %s60
      %s64 = sphi 0, %s63
      %s80 = sphi 0, %s64
      %s86 = sphi 0, %s88
      %s89 = sphi 0, %s86
      %s90 = sphi 0, %s89
      %s106 = sphi 0, %s90
      %s112 = sphi 0, %s114
      %s115 = sphi 0, %s112
      %s116 = sphi 0, %s115
      %s132 = sphi 0, %s116
      %s140 = sphi 0, %s142
      %s143 = sphi 0, %s140
      %s144 = sphi 0, %s143
      %s160 = sphi 0, %s144
      %s168 = sphi 0, %s170
      %s171 = sphi 0, %s168
      %s172 = sphi 0, %s171
      %s188 = sphi 0, %s172
    $region4: #{tpu_custom_call.1} parent=1 // loop_header_branch
      %18 = sbr.rel (%p16) target = $region8
    $region5: #{tpu_custom_call.1} parent=1 // loop_body
      %s20 = ssub.s32 %s15, 1
      %s21 = ssub.s32 %s15, 2
      %s28 = sadd.s32 1, %s23
      %p29 = scmp.ge.s32.totalorder %s28, 1
      %s30 = scalar_select %p29, 0, %s28
      %s31 = sadd.s32 1, %s22
      %s32 = scalar_select %p29, %s31, %s22
      %p33 = scmp.ge.s32.totalorder %s32, 2
      %s34 = scalar_select %p33, 0, %s32
      %s36 = sadd.s32 %s35, 1
      %p39 = scmp.eq.s32.totalorder %s15, 1
      %p40 = scmp.ne.s32.totalorder %s35, %s37
      %p41 = scmp.eq.s32.totalorder %s15, 0
      %p42 = por %p40, %p41
      %p43 = scmp.ne.s32.totalorder %s35, %s37
      %p44 = scmp.eq.s32.totalorder %s20, 1
      %p45 = por %p43, %p44
      %p46 = scmp.ne.s32.totalorder %s37, %s38
      %p47 = scmp.eq.s32.totalorder %s20, 0
      %p48 = por %p46, %p47
      %p49 = scmp.ne.s32.totalorder %s37, %s38
      %p50 = scmp.eq.s32.totalorder %s21, 1
      %p51 = por %p49, %p50
      %p53 = scmp.ne.s32.totalorder %s38, %s52
      %p54 = scmp.eq.s32.totalorder %s21, 0
      %p55 = por %p53, %p54
      %s56 = ssub.s32 %s22, %s34
      %s57 = ssub.s32 %s23, %s30
      %s58 = sor.u32 %s56, %s57
      %p59 = scmp.eq.s32.totalorder %s58, 0
      %s61 = sadd.s32 %s60, 1
      %s62 = scalar_select %p59, %s60, %s61
      %p65 = pneg %p59
      %p66 = scmp.eq.s32.totalorder %s15, 1
      %p67 = por %p65, %p66
      %p68 = scmp.ne.s32.totalorder %s60, %s63
      %p69 = scmp.eq.s32.totalorder %s15, 0
      %p70 = por %p68, %p69
      %p71 = scmp.ne.s32.totalorder %s60, %s63
      %p72 = scmp.eq.s32.totalorder %s20, 1
      %p73 = por %p71, %p72
      %p74 = scmp.ne.s32.totalorder %s63, %s64
      %p75 = scmp.eq.s32.totalorder %s20, 0
      %p76 = por %p74, %p75
      %p77 = scmp.ne.s32.totalorder %s63, %s64
      %p78 = scmp.eq.s32.totalorder %s21, 1
      %p79 = por %p77, %p78
      %p81 = scmp.ne.s32.totalorder %s64, %s80
      %p82 = scmp.eq.s32.totalorder %s21, 0
      %p83 = por %p81, %p82
      %s84 = ssub.s32 %s22, %s34
      %p85 = scmp.eq.s32.totalorder %s84, 0
      %s87 = sadd.s32 %s86, 1
      %s88 = scalar_select %p85, %s86, %s87
      %p91 = pneg %p85
      %p92 = scmp.eq.s32.totalorder %s15, 1
      %p93 = por %p91, %p92
      %p94 = scmp.ne.s32.totalorder %s86, %s89
      %p95 = scmp.eq.s32.totalorder %s15, 0
      %p96 = por %p94, %p95
      %p97 = scmp.ne.s32.totalorder %s86, %s89
      %p98 = scmp.eq.s32.totalorder %s20, 1
      %p99 = por %p97, %p98
      %p100 = scmp.ne.s32.totalorder %s89, %s90
      %p101 = scmp.eq.s32.totalorder %s20, 0
      %p102 = por %p100, %p101
      %p103 = scmp.ne.s32.totalorder %s89, %s90
      %p104 = scmp.eq.s32.totalorder %s21, 1
      %p105 = por %p103, %p104
      %p107 = scmp.ne.s32.totalorder %s90, %s106
      %p108 = scmp.eq.s32.totalorder %s21, 0
      %p109 = por %p107, %p108
      %s110 = ssub.s32 %s22, %s34
      %p111 = scmp.eq.s32.totalorder %s110, 0
      %s113 = sadd.s32 %s112, 1
      %s114 = scalar_select %p111, %s112, %s113
      %p117 = pneg %p111
      %p118 = scmp.eq.s32.totalorder %s15, 1
      %p119 = por %p117, %p118
      %p120 = scmp.ne.s32.totalorder %s112, %s115
      %p121 = scmp.eq.s32.totalorder %s15, 0
      %p122 = por %p120, %p121
      %p123 = scmp.ne.s32.totalorder %s112, %s115
      %p124 = scmp.eq.s32.totalorder %s20, 1
      %p125 = por %p123, %p124
      %p126 = scmp.ne.s32.totalorder %s115, %s116
      %p127 = scmp.eq.s32.totalorder %s20, 0
      %p128 = por %p126, %p127
      %p129 = scmp.ne.s32.totalorder %s115, %s116
      %p130 = scmp.eq.s32.totalorder %s21, 1
      %p131 = por %p129, %p130
      %p133 = scmp.ne.s32.totalorder %s116, %s132
      %p134 = scmp.eq.s32.totalorder %s21, 0
      %p135 = por %p133, %p134
      %s136 = ssub.s32 %s22, %s34
      %s137 = ssub.s32 %s23, %s30
      %s138 = sor.u32 %s136, %s137
      %p139 = scmp.eq.s32.totalorder %s138, 0
      %s141 = sadd.s32 %s140, 1
      %s142 = scalar_select %p139, %s140, %s141
      %p145 = pneg %p139
      %p146 = scmp.eq.s32.totalorder %s15, 1
      %p147 = por %p145, %p146
      %p148 = scmp.ne.s32.totalorder %s140, %s143
      %p149 = scmp.eq.s32.totalorder %s15, 0
      %p150 = por %p148, %p149
      %p151 = scmp.ne.s32.totalorder %s140, %s143
      %p152 = scmp.eq.s32.totalorder %s20, 1
      %p153 = por %p151, %p152
      %p154 = scmp.ne.s32.totalorder %s143, %s144
      %p155 = scmp.eq.s32.totalorder %s20, 0
      %p156 = por %p154, %p155
      %p157 = scmp.ne.s32.totalorder %s143, %s144
      %p158 = scmp.eq.s32.totalorder %s21, 1
      %p159 = por %p157, %p158
      %p161 = scmp.ne.s32.totalorder %s144, %s160
      %p162 = scmp.eq.s32.totalorder %s21, 0
      %p163 = por %p161, %p162
      %s164 = ssub.s32 %s22, %s34
      %s165 = ssub.s32 %s23, %s30
      %s166 = sor.u32 %s164, %s165
      %p167 = scmp.eq.s32.totalorder %s166, 0
      %s169 = sadd.s32 %s168, 1
      %s170 = scalar_select %p167, %s168, %s169
      %p173 = pneg %p167
      %p174 = scmp.eq.s32.totalorder %s15, 1
      %p175 = por %p173, %p174
      %p176 = scmp.ne.s32.totalorder %s168, %s171
      %p177 = scmp.eq.s32.totalorder %s15, 0
      %p178 = por %p176, %p177
      %p179 = scmp.ne.s32.totalorder %s168, %s171
      %p180 = scmp.eq.s32.totalorder %s20, 1
      %p181 = por %p179, %p180
      %p182 = scmp.ne.s32.totalorder %s171, %s172
      %p183 = scmp.eq.s32.totalorder %s20, 0
      %p184 = por %p182, %p183
      %p185 = scmp.ne.s32.totalorder %s171, %s172
      %p186 = scmp.eq.s32.totalorder %s21, 1
      %p187 = por %p185, %p186
      %p189 = scmp.ne.s32.totalorder %s172, %s188
      %p190 = scmp.eq.s32.totalorder %s21, 0
      %p191 = por %p189, %p190
      %p192 = scmp.le.s32.totalorder 1, %s15
      %p193 = scmp.lt.s32.totalorder %s15, 3
      %p194 = pnand %p192, %p193
      %p195 = pneg %p194
      // Predicated region
      $region9: #{tpu_custom_call.1} parent=5 // pred_check
        _
      $region10: #{tpu_custom_call.1} parent=5 // pred_check_branch
        %197 = sbr.rel (%p194) target = $region12
      $region11: #{tpu_custom_call.1} parent=5 // pred_region
        %s198 = ssub.s32 %s15, 1
        // Predicated region
        $region13: #{tpu_custom_call.1} parent=11 // pred_check
          %p199 = pneg %p48
        $region14: #{tpu_custom_call.1} parent=11 // pred_check_branch
          %201 = sbr.rel (%p199) target = $region16
        $region15: #{tpu_custom_call.1} parent=11 // pred_region
          _
        $region16: #{tpu_custom_call.1} parent=11 // pred_fallthru
          _
      $region12: #{tpu_custom_call.1} parent=5 // pred_fallthru
        _
      %p202 = scmp.lt.s32.totalorder %s15, 2
      // Predicated region
      $region17: #{tpu_custom_call.1} parent=5 // pred_check
        %p203 = pneg %p202
      $region18: #{tpu_custom_call.1} parent=5 // pred_check_branch
        %205 = sbr.rel (%p203) target = $region20
      $region19: #{tpu_custom_call.1} parent=5 // pred_region
        // Predicated region
        $region21: #{tpu_custom_call.1} parent=19 // pred_check
          %p206 = pneg %p70
        $region22: #{tpu_custom_call.1} parent=19 // pred_check_branch
          %208 = sbr.rel (%p206) target = $region24
        $region23: #{tpu_custom_call.1} parent=19 // pred_region
          %s209 = smul.u32 2, %s23
          %p210 = scmp.lt.s32.totalorder %s22, 1
          %s211 = scalar_select %p210, %s22, 1
          %p212 = scmp.lt.s32.totalorder %s209, 1
          %s213 = scalar_select %p212, %s209, 1
          %s214 = smul.addr %s211, 2
          %s215 = sadd.s32 %s213, %s214
          %s216 = scalar_lea.vmem %s1, %s215
          %s217 = smul.u32 2, %s23
        $region24: #{tpu_custom_call.1} parent=19 // pred_fallthru
          _
        // Predicated region
        $region25: #{tpu_custom_call.1} parent=19 // pred_check
          %p218 = pneg %p96
        $region26: #{tpu_custom_call.1} parent=19 // pred_check_branch
          %220 = sbr.rel (%p218) target = $region28
        $region27: #{tpu_custom_call.1} parent=19 // pred_region
          %p221 = scmp.lt.s32.totalorder %s22, 1
          %s222 = scalar_select %p221, %s22, 1
          %s223 = smul.addr %s222, 2
          %s224 = scalar_lea.vmem %s2, %s223
        $region28: #{tpu_custom_call.1} parent=19 // pred_fallthru
          _
        // Predicated region
        $region29: #{tpu_custom_call.1} parent=19 // pred_check
          %p225 = pneg %p122
        $region30: #{tpu_custom_call.1} parent=19 // pred_check_branch
          %227 = sbr.rel (%p225) target = $region32
        $region31: #{tpu_custom_call.1} parent=19 // pred_region
          %p228 = scmp.lt.s32.totalorder %s22, 1
          %s229 = scalar_select %p228, %s22, 1
          %s230 = smul.addr %s229, 2
          %s231 = smul.addr %s230, 4
          %s232 = scalar_lea.vmem %s3, %s231
        $region32: #{tpu_custom_call.1} parent=19 // pred_fallthru
          _
        // Predicated region
        $region33: #{tpu_custom_call.1} parent=19 // pred_check
          %p233 = pneg %p150
        $region34: #{tpu_custom_call.1} parent=19 // pred_check_branch
          %235 = sbr.rel (%p233) target = $region36
        $region35: #{tpu_custom_call.1} parent=19 // pred_region
          %s236 = smul.u32 2, %s23
          %p237 = scmp.lt.s32.totalorder %s22, 1
          %s238 = scalar_select %p237, %s22, 1
          %p239 = scmp.lt.s32.totalorder %s236, 1
          %s240 = scalar_select %p239, %s236, 1
          %s241 = smul.addr %s238, 2
          %s242 = sadd.s32 %s240, %s241
          %s243 = smul.addr %s242, 4
          %s244 = scalar_lea.vmem %s4, %s243
          %s245 = smul.u32 2, %s23
        $region36: #{tpu_custom_call.1} parent=19 // pred_fallthru
          _
      $region20: #{tpu_custom_call.1} parent=5 // pred_fallthru
        _
      %p246 = scmp.le.s32.totalorder 1, %s15
      %p247 = scmp.lt.s32.totalorder %s15, 3
      %p248 = pnand %p246, %p247
      %p249 = pneg %p248
      // Predicated region
      $region37: #{tpu_custom_call.1} parent=5 // pred_check
        _
      $region38: #{tpu_custom_call.1} parent=5 // pred_check_branch
        %251 = sbr.rel (%p248) target = $region40
      $region39: #{tpu_custom_call.1} parent=5 // pred_region
        %s252 = ssub.s32 %s15, 1
        %p253 = pneg %p48
        %p254 = pneg %p45
        %s255 = smul.u32 2, %s25
        %p256 = scmp.lt.s32.totalorder %s24, 1
        %s257 = scalar_select %p256, %s24, 1
        %p258 = scmp.lt.s32.totalorder %s255, 1
        %s259 = scalar_select %p258, %s255, 1
        %s260 = smul.addr %s257, 2
        %s261 = sadd.s32 %s259, %s260
        %s262 = scalar_lea.vmem %s1, %s261
        %p263 = pneg %p76
        %p264 = pneg %p73
        %p265 = scmp.lt.s32.totalorder %s24, 1
        %s266 = scalar_select %p265, %s24, 1
        %s267 = smul.addr %s266, 2
        %s268 = scalar_lea.vmem %s2, %s267
        %p269 = pneg %p102
        %p270 = pneg %p99
        %p271 = scmp.lt.s32.totalorder %s24, 1
        %s272 = scalar_select %p271, %s24, 1
        %s273 = smul.addr %s272, 2
        %s274 = smul.addr %s273, 4
        %s275 = scalar_lea.vmem %s3, %s274
        %p276 = pneg %p128
        %p277 = pneg %p125
        %s278 = smul.u32 2, %s25
        %p279 = scmp.lt.s32.totalorder %s24, 1
        %s280 = scalar_select %p279, %s24, 1
        %p281 = scmp.lt.s32.totalorder %s278, 1
        %s282 = scalar_select %p281, %s278, 1
        %s283 = smul.addr %s280, 2
        %s284 = sadd.s32 %s282, %s283
        %s285 = smul.addr %s284, 4
        %s286 = scalar_lea.vmem %s4, %s285
        %p287 = pneg %p156
        %p288 = pneg %p153
        %p289 = pneg %p184
        %p290 = pneg %p181
        %s291 = sand.u32 %s171, 1
        %s292 = scalar_lea.sflag [#allocation4], %s291
        %s293 = sand.u32 %s171, 1
        %s294 = smul.addr %s293, 8
        %s295 = scalar_lea.vmem [#allocation3], %s294
        %s296 = smul.u32 2, %s25
        %p297 = scmp.lt.s32.totalorder %s24, 1
        %s298 = scalar_select %p297, %s24, 1
        %p299 = scmp.lt.s32.totalorder %s296, 1
        %s300 = scalar_select %p299, %s296, 1
        %s301 = smul.addr %s298, 2
        %s302 = sadd.s32 %s300, %s301
        %s303 = scalar_lea.vmem %s1, %s302
        %s304 = smul.u32 2, %s25
        %p305 = scmp.lt.s32.totalorder %s24, 1
        %s306 = scalar_select %p305, %s24, 1
        %s307 = smul.addr %s306, 2
        %s308 = scalar_lea.vmem %s2, %s307
        %p309 = scmp.lt.s32.totalorder %s24, 1
        %s310 = scalar_select %p309, %s24, 1
        %s311 = smul.addr %s310, 2
        %s312 = smul.addr %s311, 4
        %s313 = scalar_lea.vmem %s3, %s312
        %s314 = smul.u32 2, %s25
        %p315 = scmp.lt.s32.totalorder %s24, 1
        %s316 = scalar_select %p315, %s24, 1
        %p317 = scmp.lt.s32.totalorder %s314, 1
        %s318 = scalar_select %p317, %s314, 1
        %s319 = smul.addr %s316, 2
        %s320 = sadd.s32 %s318, %s319
        %s321 = smul.addr %s320, 4
        %s322 = scalar_lea.vmem %s4, %s321
        %s323 = smul.u32 2, %s25
        %s324 = smul.u32 2, %s25
        %v326 = vld [vmem:[%s303] sm:$0x3]
        %v327 = vld [vmem:[%s308] sm:$0x3]
        %329 = vst [vmem:[#allocation1] ss:$9 sm:$0xff] %v327
        %v330 = vld [vmem:[#allocation1] sm:$0xff]
        %v331 = vld [vmem:[#allocation1 + $0x9] sm:$0xff]
        %334 = vxpose.binary.xlu0.c.b16.start [1/16] %v331, %v330, 128
        %335 = vxpose.binary.xlu0.c.b16.cont [2/16] 0, 0, 128
        %336 = vxpose.binary.xlu0.c.b16.cont [3/16] 0, 0, 128
        %337 = vxpose.binary.xlu0.c.b16.cont [4/16] 0, 0, 128
        %338 = vxpose.binary.xlu0.c.b16.cont [5/16] 0, 0, 128
        %339 = vxpose.binary.xlu0.c.b16.cont [6/16] 0, 0, 128
        %340 = vxpose.binary.xlu0.c.b16.cont [7/16] 0, 0, 128
        %341 = vxpose.binary.xlu0.c.b16.end [8/16] 0, 0, 128
        %v342 = vpop.trf.xlu0
        %v343 = vpop.trf.xlu0
        %v344 = vpop.trf.xlu0
        %v345 = vpop.trf.xlu0
        %v346 = vpop.trf.xlu0
        %v347 = vpop.trf.xlu0
        %v348 = vpop.trf.xlu0
        %v349 = vpop.trf.xlu0
        %v350 = vpop.trf.xlu0
        %v351 = vpop.trf.xlu0
        %v352 = vpop.trf.xlu0
        %v353 = vpop.trf.xlu0
        %v354 = vpop.trf.xlu0
        %v355 = vpop.trf.xlu0
        %v356 = vpop.trf.xlu0
        %v357 = vpop.trf.xlu0
        %359 = vst [vmem:[#allocation1] ss:$9 sm:$0xff] %v326
        %v360 = vld [vmem:[#allocation1] sm:$0xff]
        %v361 = vld [vmem:[#allocation1 + $0x9] sm:$0xff]
        %vm362 = vcmask 15360
        %v364 = vsel %vm362, %v342, 0
        %v367 = vsel %vm362, %v344, 0
        %v370 = vsel %vm362, %v346, 0
        %v373 = vsel %vm362, %v348, 0
        %v376 = vsel %vm362, %v350, 0
        %v379 = vsel %vm362, %v352, 0
        %v382 = vsel %vm362, %v354, 0
        %v385 = vsel %vm362, %v356, 0
        %v388 = vsel %vm362, %v343, 0
        %v391 = vsel %vm362, %v345, 0
        %v394 = vsel %vm362, %v347, 0
        %v397 = vsel %vm362, %v349, 0
        %v400 = vsel %vm362, %v351, 0
        %v403 = vsel %vm362, %v353, 0
        %v406 = vsel %vm362, %v355, 0
        %v409 = vsel %vm362, %v357, 0
        %vm411 = vcmask 1040384
        %v412 = vsel %vm411, %v360, 0
        %v414 = vsel %vm411, %v361, 0
        %416 = vmatpush.bf16.msra.mxu0 0
        %417 = vmatpush.bf16.msra.mxu0 0
        %418 = vmatpush.bf16.msra.mxu0 0
        %419 = vmatpush.bf16.msra.mxu0 0
        %420 = vmatpush.bf16.msra.mxu0 0
        %421 = vmatpush.bf16.msra.mxu0 0
        %422 = vmatpush.bf16.msra.mxu0 0
        %423 = vmatpush.bf16.msra.mxu0 %v412
        %424 = vmatmul.bf16.gmra.mxu0 %v364
        %v425 = vpop.f32.mrf.mxu0
        %v426 = vadd.f32 0.0, %v425
        %v427 = vpop.f32.mrf.mxu0
        %v428 = vadd.f32 0.0, %v427
        %429 = vmatmul.bf16.gmra.mxu0 %v367
        %v430 = vpop.f32.mrf.mxu0
        %v431 = vadd.f32 0.0, %v430
        %v432 = vpop.f32.mrf.mxu0
        %v433 = vadd.f32 0.0, %v432
        %434 = vmatmul.bf16.gmra.mxu0 %v370
        %v435 = vpop.f32.mrf.mxu0
        %v436 = vadd.f32 0.0, %v435
        %v437 = vpop.f32.mrf.mxu0
        %v438 = vadd.f32 0.0, %v437
        %439 = vmatmul.bf16.gmra.mxu0 %v373
        %v440 = vpop.f32.mrf.mxu0
        %v441 = vadd.f32 0.0, %v440
        %v442 = vpop.f32.mrf.mxu0
        %v443 = vadd.f32 0.0, %v442
        %444 = vmatmul.bf16.gmra.mxu0 %v376
        %v445 = vpop.f32.mrf.mxu0
        %v446 = vadd.f32 0.0, %v445
        %v447 = vpop.f32.mrf.mxu0
        %v448 = vadd.f32 0.0, %v447
        %449 = vmatmul.bf16.gmra.mxu0 %v379
        %v450 = vpop.f32.mrf.mxu0
        %v451 = vadd.f32 0.0, %v450
        %v452 = vpop.f32.mrf.mxu0
        %v453 = vadd.f32 0.0, %v452
        %454 = vmatmul.bf16.gmra.mxu0 %v382
        %v455 = vpop.f32.mrf.mxu0
        %v456 = vadd.f32 0.0, %v455
        %v457 = vpop.f32.mrf.mxu0
        %v458 = vadd.f32 0.0, %v457
        %459 = vmatmul.bf16.gmra.mxu0 %v385
        %v460 = vpop.f32.mrf.mxu0
        %v461 = vadd.f32 0.0, %v460
        %v462 = vpop.f32.mrf.mxu0
        %v463 = vadd.f32 0.0, %v462
        %464 = vmatmul.bf16.gmra.mxu0 %v388
        %v465 = vpop.f32.mrf.mxu0
        %v466 = vadd.f32 0.0, %v465
        %v467 = vpop.f32.mrf.mxu0
        %v468 = vadd.f32 0.0, %v467
        %469 = vmatmul.bf16.gmra.mxu0 %v391
        %v470 = vpop.f32.mrf.mxu0
        %v471 = vadd.f32 0.0, %v470
        %v472 = vpop.f32.mrf.mxu0
        %v473 = vadd.f32 0.0, %v472
        %474 = vmatmul.bf16.gmra.mxu0 %v394
        %v475 = vpop.f32.mrf.mxu0
        %v476 = vadd.f32 0.0, %v475
        %v477 = vpop.f32.mrf.mxu0
        %v478 = vadd.f32 0.0, %v477
        %479 = vmatmul.bf16.gmra.mxu0 %v397
        %v480 = vpop.f32.mrf.mxu0
        %v481 = vadd.f32 0.0, %v480
        %v482 = vpop.f32.mrf.mxu0
        %v483 = vadd.f32 0.0, %v482
        %484 = vmatmul.bf16.gmra.mxu0 %v400
        %v485 = vpop.f32.mrf.mxu0
        %v486 = vadd.f32 0.0, %v485
        %v487 = vpop.f32.mrf.mxu0
        %v488 = vadd.f32 0.0, %v487
        %489 = vmatmul.bf16.gmra.mxu0 %v403
        %v490 = vpop.f32.mrf.mxu0
        %v491 = vadd.f32 0.0, %v490
        %v492 = vpop.f32.mrf.mxu0
        %v493 = vadd.f32 0.0, %v492
        %494 = vmatmul.bf16.gmra.mxu0 %v406
        %v495 = vpop.f32.mrf.mxu0
        %v496 = vadd.f32 0.0, %v495
        %v497 = vpop.f32.mrf.mxu0
        %v498 = vadd.f32 0.0, %v497
        %499 = vmatmul.bf16.gmra.mxu0 %v409
        %v500 = vpop.f32.mrf.mxu0
        %v501 = vadd.f32 0.0, %v500
        %v502 = vpop.f32.mrf.mxu0
        %v503 = vadd.f32 0.0, %v502
        %504 = vdwg.mxu0
        %505 = vmatpush.bf16.msra.mxu0 0
        %506 = vmatpush.bf16.msra.mxu0 0
        %507 = vmatpush.bf16.msra.mxu0 0
        %508 = vmatpush.bf16.msra.mxu0 0
        %509 = vmatpush.bf16.msra.mxu0 0
        %510 = vmatpush.bf16.msra.mxu0 0
        %511 = vmatpush.bf16.msra.mxu0 0
        %512 = vmatpush.bf16.msra.mxu0 %v414
        %513 = vmatmul.bf16.gmra.mxu0 %v364
        %v514 = vpop.f32.mrf.mxu0
        %v515 = vadd.f32 0.0, %v514
        %v516 = vpop.f32.mrf.mxu0
        %v517 = vadd.f32 0.0, %v516
        %518 = vmatmul.bf16.gmra.mxu0 %v367
        %v519 = vpop.f32.mrf.mxu0
        %v520 = vadd.f32 0.0, %v519
        %v521 = vpop.f32.mrf.mxu0
        %v522 = vadd.f32 0.0, %v521
        %523 = vmatmul.bf16.gmra.mxu0 %v370
        %v524 = vpop.f32.mrf.mxu0
        %v525 = vadd.f32 0.0, %v524
        %v526 = vpop.f32.mrf.mxu0
        %v527 = vadd.f32 0.0, %v526
        %528 = vmatmul.bf16.gmra.mxu0 %v373
        %v529 = vpop.f32.mrf.mxu0
        %v530 = vadd.f32 0.0, %v529
        %v531 = vpop.f32.mrf.mxu0
        %v532 = vadd.f32 0.0, %v531
        %533 = vmatmul.bf16.gmra.mxu0 %v376
        %v534 = vpop.f32.mrf.mxu0
        %v535 = vadd.f32 0.0, %v534
        %v536 = vpop.f32.mrf.mxu0
        %v537 = vadd.f32 0.0, %v536
        %538 = vmatmul.bf16.gmra.mxu0 %v379
        %v539 = vpop.f32.mrf.mxu0
        %v540 = vadd.f32 0.0, %v539
        %v541 = vpop.f32.mrf.mxu0
        %v542 = vadd.f32 0.0, %v541
        %543 = vmatmul.bf16.gmra.mxu0 %v382
        %v544 = vpop.f32.mrf.mxu0
        %v545 = vadd.f32 0.0, %v544
        %v546 = vpop.f32.mrf.mxu0
        %v547 = vadd.f32 0.0, %v546
        %548 = vmatmul.bf16.gmra.mxu0 %v385
        %v549 = vpop.f32.mrf.mxu0
        %v550 = vadd.f32 0.0, %v549
        %v551 = vpop.f32.mrf.mxu0
        %v552 = vadd.f32 0.0, %v551
        %553 = vmatmul.bf16.gmra.mxu0 %v388
        %v554 = vpop.f32.mrf.mxu0
        %v555 = vadd.f32 0.0, %v554
        %v556 = vpop.f32.mrf.mxu0
        %v557 = vadd.f32 0.0, %v556
        %558 = vmatmul.bf16.gmra.mxu0 %v391
        %v559 = vpop.f32.mrf.mxu0
        %v560 = vadd.f32 0.0, %v559
        %v561 = vpop.f32.mrf.mxu0
        %v562 = vadd.f32 0.0, %v561
        %563 = vmatmul.bf16.gmra.mxu0 %v394
        %v564 = vpop.f32.mrf.mxu0
        %v565 = vadd.f32 0.0, %v564
        %v566 = vpop.f32.mrf.mxu0
        %v567 = vadd.f32 0.0, %v566
        %568 = vmatmul.bf16.gmra.mxu0 %v397
        %v569 = vpop.f32.mrf.mxu0
        %v570 = vadd.f32 0.0, %v569
        %v571 = vpop.f32.mrf.mxu0
        %v572 = vadd.f32 0.0, %v571
        %573 = vmatmul.bf16.gmra.mxu0 %v400
        %v574 = vpop.f32.mrf.mxu0
        %v575 = vadd.f32 0.0, %v574
        %v576 = vpop.f32.mrf.mxu0
        %v577 = vadd.f32 0.0, %v576
        %578 = vmatmul.bf16.gmra.mxu0 %v403
        %v579 = vpop.f32.mrf.mxu0
        %v580 = vadd.f32 0.0, %v579
        %v581 = vpop.f32.mrf.mxu0
        %v582 = vadd.f32 0.0, %v581
        %583 = vmatmul.bf16.gmra.mxu0 %v406
        %v584 = vpop.f32.mrf.mxu0
        %v585 = vadd.f32 0.0, %v584
        %v586 = vpop.f32.mrf.mxu0
        %v587 = vadd.f32 0.0, %v586
        %588 = vmatmul.bf16.gmra.mxu0 %v409
        %v589 = vpop.f32.mrf.mxu0
        %v590 = vadd.f32 0.0, %v589
        %v591 = vpop.f32.mrf.mxu0
        %v592 = vadd.f32 0.0, %v591
        %593 = vdwg.mxu0
        %v594 = vmax.f32 %v426, %v431
        %v595 = vmax.f32 %v428, %v433
        %v596 = vmax.f32 %v594, %v436
        %v597 = vmax.f32 %v595, %v438
        %v598 = vmax.f32 %v596, %v441
        %v599 = vmax.f32 %v597, %v443
        %v600 = vmax.f32 %v598, %v446
        %v601 = vmax.f32 %v599, %v448
        %v602 = vmax.f32 %v600, %v451
        %v603 = vmax.f32 %v601, %v453
        %v604 = vmax.f32 %v602, %v456
        %v605 = vmax.f32 %v603, %v458
        %v606 = vmax.f32 %v604, %v461
        %v607 = vmax.f32 %v605, %v463
        %v608 = vmax.f32 %v606, %v466
        %v609 = vmax.f32 %v607, %v468
        %v610 = vmax.f32 %v608, %v471
        %v611 = vmax.f32 %v609, %v473
        %v612 = vmax.f32 %v610, %v476
        %v613 = vmax.f32 %v611, %v478
        %v614 = vmax.f32 %v612, %v481
        %v615 = vmax.f32 %v613, %v483
        %v616 = vmax.f32 %v614, %v486
        %v617 = vmax.f32 %v615, %v488
        %v618 = vmax.f32 %v616, %v491
        %v619 = vmax.f32 %v617, %v493
        %v620 = vmax.f32 %v618, %v496
        %v621 = vmax.f32 %v619, %v498
        %v622 = vmax.f32 %v620, %v501
        %v623 = vmax.f32 %v621, %v503
        %v624 = vmax.f32 %v622, %v623
        %v625 = vrot.slane %v624, 4
        %v626 = vmax.f32 %v624, %v625
        %v627 = vrot.slane %v626, 2
        %v628 = vmax.f32 %v626, %v627
        %v629 = vrot.slane %v628, 1
        %v630 = vmax.f32 %v628, %v629
        %v631 = vmax.f32 %v515, %v520
        %v632 = vmax.f32 %v517, %v522
        %v633 = vmax.f32 %v631, %v525
        %v634 = vmax.f32 %v632, %v527
        %v635 = vmax.f32 %v633, %v530
        %v636 = vmax.f32 %v634, %v532
        %v637 = vmax.f32 %v635, %v535
        %v638 = vmax.f32 %v636, %v537
        %v639 = vmax.f32 %v637, %v540
        %v640 = vmax.f32 %v638, %v542
        %v641 = vmax.f32 %v639, %v545
        %v642 = vmax.f32 %v640, %v547
        %v643 = vmax.f32 %v641, %v550
        %v644 = vmax.f32 %v642, %v552
        %v645 = vmax.f32 %v643, %v555
        %v646 = vmax.f32 %v644, %v557
        %v647 = vmax.f32 %v645, %v560
        %v648 = vmax.f32 %v646, %v562
        %v649 = vmax.f32 %v647, %v565
        %v650 = vmax.f32 %v648, %v567
        %v651 = vmax.f32 %v649, %v570
        %v652 = vmax.f32 %v650, %v572
        %v653 = vmax.f32 %v651, %v575
        %v654 = vmax.f32 %v652, %v577
        %v655 = vmax.f32 %v653, %v580
        %v656 = vmax.f32 %v654, %v582
        %v657 = vmax.f32 %v655, %v585
        %v658 = vmax.f32 %v656, %v587
        %v659 = vmax.f32 %v657, %v590
        %v660 = vmax.f32 %v658, %v592
        %v661 = vmax.f32 %v659, %v660
        %v662 = vrot.slane %v661, 4
        %v663 = vmax.f32 %v661, %v662
        %v664 = vrot.slane %v663, 2
        %v665 = vmax.f32 %v663, %v664
        %v666 = vrot.slane %v665, 1
        %v667 = vmax.f32 %v665, %v666
        %v668 = vsub.f32 %v426, %v630
        %v669 = vsub.f32 %v515, %v667
        %v670 = vsub.f32 %v428, %v630
        %v671 = vsub.f32 %v517, %v667
        %v672 = vsub.f32 %v431, %v630
        %v673 = vsub.f32 %v520, %v667
        %v674 = vsub.f32 %v433, %v630
        %v675 = vsub.f32 %v522, %v667
        %v676 = vsub.f32 %v436, %v630
        %v677 = vsub.f32 %v525, %v667
        %v678 = vsub.f32 %v438, %v630
        %v679 = vsub.f32 %v527, %v667
        %v680 = vsub.f32 %v441, %v630
        %v681 = vsub.f32 %v530, %v667
        %v682 = vsub.f32 %v443, %v630
        %v683 = vsub.f32 %v532, %v667
        %v684 = vsub.f32 %v446, %v630
        %v685 = vsub.f32 %v535, %v667
        %v686 = vsub.f32 %v448, %v630
        %v687 = vsub.f32 %v537, %v667
        %v688 = vsub.f32 %v451, %v630
        %v689 = vsub.f32 %v540, %v667
        %v690 = vsub.f32 %v453, %v630
        %v691 = vsub.f32 %v542, %v667
        %v692 = vsub.f32 %v456, %v630
        %v693 = vsub.f32 %v545, %v667
        %v694 = vsub.f32 %v458, %v630
        %v695 = vsub.f32 %v547, %v667
        %v696 = vsub.f32 %v461, %v630
        %v697 = vsub.f32 %v550, %v667
        %v698 = vsub.f32 %v463, %v630
        %v699 = vsub.f32 %v552, %v667
        %v700 = vsub.f32 %v466, %v630
        %v701 = vsub.f32 %v555, %v667
        %v702 = vsub.f32 %v468, %v630
        %v703 = vsub.f32 %v557, %v667
        %v704 = vsub.f32 %v471, %v630
        %v705 = vsub.f32 %v560, %v667
        %v706 = vsub.f32 %v473, %v630
        %v707 = vsub.f32 %v562, %v667
        %v708 = vsub.f32 %v476, %v630
        %v709 = vsub.f32 %v565, %v667
        %v710 = vsub.f32 %v478, %v630
        %v711 = vsub.f32 %v567, %v667
        %v712 = vsub.f32 %v481, %v630
        %v713 = vsub.f32 %v570, %v667
        %v714 = vsub.f32 %v483, %v630
        %v715 = vsub.f32 %v572, %v667
        %v716 = vsub.f32 %v486, %v630
        %v717 = vsub.f32 %v575, %v667
        %v718 = vsub.f32 %v488, %v630
        %v719 = vsub.f32 %v577, %v667
        %v720 = vsub.f32 %v491, %v630
        %v721 = vsub.f32 %v580, %v667
        %v722 = vsub.f32 %v493, %v630
        %v723 = vsub.f32 %v582, %v667
        %v724 = vsub.f32 %v496, %v630
        %v725 = vsub.f32 %v585, %v667
        %v726 = vsub.f32 %v498, %v630
        %v727 = vsub.f32 %v587, %v667
        %v728 = vsub.f32 %v501, %v630
        %v729 = vsub.f32 %v590, %v667
        %v730 = vsub.f32 %v503, %v630
        %v731 = vsub.f32 %v592, %v667
        %v732 = vmul.f32 %v668, 1.442695
        %v733 = vpow.pop %v732
        %v734 = vmul.f32 %v669, 1.442695
        %v735 = vpow.pop %v734
        %v736 = vmul.f32 %v670, 1.442695
        %v737 = vpow.pop %v736
        %v738 = vmul.f32 %v671, 1.442695
        %v739 = vpow.pop %v738
        %v740 = vmul.f32 %v672, 1.442695
        %v741 = vpow.pop %v740
        %v742 = vmul.f32 %v673, 1.442695
        %v743 = vpow.pop %v742
        %v744 = vmul.f32 %v674, 1.442695
        %v745 = vpow.pop %v744
        %v746 = vmul.f32 %v675, 1.442695
        %v747 = vpow.pop %v746
        %v748 = vmul.f32 %v676, 1.442695
        %v749 = vpow.pop %v748
        %v750 = vmul.f32 %v677, 1.442695
        %v751 = vpow.pop %v750
        %v752 = vmul.f32 %v678, 1.442695
        %v753 = vpow.pop %v752
        %v754 = vmul.f32 %v679, 1.442695
        %v755 = vpow.pop %v754
        %v756 = vmul.f32 %v680, 1.442695
        %v757 = vpow.pop %v756
        %v758 = vmul.f32 %v681, 1.442695
        %v759 = vpow.pop %v758
        %v760 = vmul.f32 %v682, 1.442695
        %v761 = vpow.pop %v760
        %v762 = vmul.f32 %v683, 1.442695
        %v763 = vpow.pop %v762
        %v764 = vmul.f32 %v684, 1.442695
        %v765 = vpow.pop %v764
        %v766 = vmul.f32 %v685, 1.442695
        %v767 = vpow.pop %v766
        %v768 = vmul.f32 %v686, 1.442695
        %v769 = vpow.pop %v768
        %v770 = vmul.f32 %v687, 1.442695
        %v771 = vpow.pop %v770
        %v772 = vmul.f32 %v688, 1.442695
        %v773 = vpow.pop %v772
        %v774 = vmul.f32 %v689, 1.442695
        %v775 = vpow.pop %v774
        %v776 = vmul.f32 %v690, 1.442695
        %v777 = vpow.pop %v776
        %v778 = vmul.f32 %v691, 1.442695
        %v779 = vpow.pop %v778
        %v780 = vmul.f32 %v692, 1.442695
        %v781 = vpow.pop %v780
        %v782 = vmul.f32 %v693, 1.442695
        %v783 = vpow.pop %v782
        %v784 = vmul.f32 %v694, 1.442695
        %v785 = vpow.pop %v784
        %v786 = vmul.f32 %v695, 1.442695
        %v787 = vpow.pop %v786
        %v788 = vmul.f32 %v696, 1.442695
        %v789 = vpow.pop %v788
        %v790 = vmul.f32 %v697, 1.442695
        %v791 = vpow.pop %v790
        %v792 = vmul.f32 %v698, 1.442695
        %v793 = vpow.pop %v792
        %v794 = vmul.f32 %v699, 1.442695
        %v795 = vpow.pop %v794
        %v796 = vmul.f32 %v700, 1.442695
        %v797 = vpow.pop %v796
        %v798 = vmul.f32 %v701, 1.442695
        %v799 = vpow.pop %v798
        %v800 = vmul.f32 %v702, 1.442695
        %v801 = vpow.pop %v800
        %v802 = vmul.f32 %v703, 1.442695
        %v803 = vpow.pop %v802
        %v804 = vmul.f32 %v704, 1.442695
        %v805 = vpow.pop %v804
        %v806 = vmul.f32 %v705, 1.442695
        %v807 = vpow.pop %v806
        %v808 = vmul.f32 %v706, 1.442695
        %v809 = vpow.pop %v808
        %v810 = vmul.f32 %v707, 1.442695
        %v811 = vpow.pop %v810
        %v812 = vmul.f32 %v708, 1.442695
        %v813 = vpow.pop %v812
        %v814 = vmul.f32 %v709, 1.442695
        %v815 = vpow.pop %v814
        %v816 = vmul.f32 %v710, 1.442695
        %v817 = vpow.pop %v816
        %v818 = vmul.f32 %v711, 1.442695
        %v819 = vpow.pop %v818
        %v820 = vmul.f32 %v712, 1.442695
        %v821 = vpow.pop %v820
        %v822 = vmul.f32 %v713, 1.442695
        %v823 = vpow.pop %v822
        %v824 = vmul.f32 %v714, 1.442695
        %v825 = vpow.pop %v824
        %v826 = vmul.f32 %v715, 1.442695
        %v827 = vpow.pop %v826
        %v828 = vmul.f32 %v716, 1.442695
        %v829 = vpow.pop %v828
        %v830 = vmul.f32 %v717, 1.442695
        %v831 = vpow.pop %v830
        %v832 = vmul.f32 %v718, 1.442695
        %v833 = vpow.pop %v832
        %v834 = vmul.f32 %v719, 1.442695
        %v835 = vpow.pop %v834
        %v836 = vmul.f32 %v720, 1.442695
        %v837 = vpow.pop %v836
        %v838 = vmul.f32 %v721, 1.442695
        %v839 = vpow.pop %v838
        %v840 = vmul.f32 %v722, 1.442695
        %v841 = vpow.pop %v840
        %v842 = vmul.f32 %v723, 1.442695
        %v843 = vpow.pop %v842
        %v844 = vmul.f32 %v724, 1.442695
        %v845 = vpow.pop %v844
        %v846 = vmul.f32 %v725, 1.442695
        %v847 = vpow.pop %v846
        %v848 = vmul.f32 %v726, 1.442695
        %v849 = vpow.pop %v848
        %v850 = vmul.f32 %v727, 1.442695
        %v851 = vpow.pop %v850
        %v852 = vmul.f32 %v728, 1.442695
        %v853 = vpow.pop %v852
        %v854 = vmul.f32 %v729, 1.442695
        %v855 = vpow.pop %v854
        %v856 = vmul.f32 %v730, 1.442695
        %v857 = vpow.pop %v856
        %v858 = vmul.f32 %v731, 1.442695
        %v859 = vpow.pop %v858
        %v860 = vpack.c.bf16 %v737, %v733
        %v861 = vpack.c.bf16 %v739, %v735
        %v862 = vpack.c.bf16 %v745, %v741
        %v863 = vpack.c.bf16 %v747, %v743
        %v864 = vpack.c.bf16 %v753, %v749
        %v865 = vpack.c.bf16 %v755, %v751
        %v866 = vpack.c.bf16 %v761, %v757
        %v867 = vpack.c.bf16 %v763, %v759
        %v868 = vpack.c.bf16 %v769, %v765
        %v869 = vpack.c.bf16 %v771, %v767
        %v870 = vpack.c.bf16 %v777, %v773
        %v871 = vpack.c.bf16 %v779, %v775
        %v872 = vpack.c.bf16 %v785, %v781
        %v873 = vpack.c.bf16 %v787, %v783
        %v874 = vpack.c.bf16 %v793, %v789
        %v875 = vpack.c.bf16 %v795, %v791
        %v876 = vpack.c.bf16 %v801, %v797
        %v877 = vpack.c.bf16 %v803, %v799
        %v878 = vpack.c.bf16 %v809, %v805
        %v879 = vpack.c.bf16 %v811, %v807
        %v880 = vpack.c.bf16 %v817, %v813
        %v881 = vpack.c.bf16 %v819, %v815
        %v882 = vpack.c.bf16 %v825, %v821
        %v883 = vpack.c.bf16 %v827, %v823
        %v884 = vpack.c.bf16 %v833, %v829
        %v885 = vpack.c.bf16 %v835, %v831
        %v886 = vpack.c.bf16 %v841, %v837
        %v887 = vpack.c.bf16 %v843, %v839
        %v888 = vpack.c.bf16 %v849, %v845
        %v889 = vpack.c.bf16 %v851, %v847
        %v890 = vpack.c.bf16 %v857, %v853
        %v891 = vpack.c.bf16 %v859, %v855
        %v892 = vld [vmem:[%s313] sm:$0x77]
        %v894 = vunpack.c.l.b16 %v892
        %v895 = vunpack.c.h.b16 %v892
        %v896 = vpack.c.b16 %v894, %v894
        %v897 = vpack.c.b16 %v895, %v895
        %900 = vmatpush.bf16.msra.mxu0 %v874
        %901 = vmatpush.bf16.msra.mxu0 %v872
        %902 = vmatpush.bf16.msra.mxu0 %v870
        %903 = vmatpush.bf16.msra.mxu0 %v868
        %904 = vmatpush.bf16.msra.mxu0 %v866
        %905 = vmatpush.bf16.msra.mxu0 %v864
        %906 = vmatpush.bf16.msra.mxu0 %v862
        %907 = vmatpush.bf16.msra.mxu0 %v860
        %908 = vmatmul.bf16.gmra.mxu0 %v896
        %v909 = vpop.f32.mrf.mxu0
        %v910 = vadd.f32 0.0, %v909
        %v911 = vpop.f32.mrf.mxu0
        %912 = vdwg.mxu0
        %913 = vmatpush.bf16.msra.mxu0 %v890
        %914 = vmatpush.bf16.msra.mxu0 %v888
        %915 = vmatpush.bf16.msra.mxu0 %v886
        %916 = vmatpush.bf16.msra.mxu0 %v884
        %917 = vmatpush.bf16.msra.mxu0 %v882
        %918 = vmatpush.bf16.msra.mxu0 %v880
        %919 = vmatpush.bf16.msra.mxu0 %v878
        %920 = vmatpush.bf16.msra.mxu0 %v876
        %921 = vmatmul.bf16.gmra.mxu0 %v897
        %v922 = vpop.f32.mrf.mxu0
        %v923 = vadd.f32 %v910, %v922
        %v924 = vpop.f32.mrf.mxu0
        %925 = vdwg.mxu0
        %926 = vmatpush.bf16.msra.mxu0 %v875
        %927 = vmatpush.bf16.msra.mxu0 %v873
        %928 = vmatpush.bf16.msra.mxu0 %v871
        %929 = vmatpush.bf16.msra.mxu0 %v869
        %930 = vmatpush.bf16.msra.mxu0 %v867
        %931 = vmatpush.bf16.msra.mxu0 %v865
        %932 = vmatpush.bf16.msra.mxu0 %v863
        %933 = vmatpush.bf16.msra.mxu0 %v861
        %934 = vmatmul.bf16.gmra.mxu0 %v896
        %v935 = vpop.f32.mrf.mxu0
        %v936 = vadd.f32 0.0, %v935
        %v937 = vpop.f32.mrf.mxu0
        %938 = vdwg.mxu0
        %939 = vmatpush.bf16.msra.mxu0 %v891
        %940 = vmatpush.bf16.msra.mxu0 %v889
        %941 = vmatpush.bf16.msra.mxu0 %v887
        %942 = vmatpush.bf16.msra.mxu0 %v885
        %943 = vmatpush.bf16.msra.mxu0 %v883
        %944 = vmatpush.bf16.msra.mxu0 %v881
        %945 = vmatpush.bf16.msra.mxu0 %v879
        %946 = vmatpush.bf16.msra.mxu0 %v877
        %947 = vmatmul.bf16.gmra.mxu0 %v897
        %v948 = vpop.f32.mrf.mxu0
        %v949 = vadd.f32 %v936, %v948
        %v950 = vpop.f32.mrf.mxu0
        %951 = vdwg.mxu0
        %v952 = vrcp.pop %v923
        %v953 = vrcp.pop %v949
        %s954 = sld [smem:[#allocation2]]
        %v955 = vperm.slane %v952, 4
        %v956 = vperm.slane %v953, 4
        %v957 = vmul.f32 %v923, %v955
        %v958 = vmul.f32 %v949, %v956
        %v959 = vstv %s954
        %v960 = vmul.f32 %v959, %v957
        %v961 = vmul.f32 %v959, %v958
        %v962 = vld [vmem:[%s322] sm:$0xff]
        %964 = vst [vmem:[#allocation1] ss:$2 sm:$0xff] %v962
        %v965 = vld.sshfl [vmem:[#allocation1] sm:$0xff pattern:$0x75316420]
        %v966 = vld.sshfl [vmem:[#allocation1 + $0x8] sm:$0xff pattern:$0x75316420]
        %v969 = vadd.f32 %v960, %v965
        %v970 = vadd.f32 %v961, %v966
        %v973 = vrot.slane %v970, 4
        %vm974 = vcmask 1043456
        %v975 = vsel %vm974, %v969, %v973
        %977 = vst [vmem:[%s295] sm:$0xff] %v975
        %s978 = sand.u32 %s171, 1
        %s979 = scalar_lea.sflag [#allocation4], %s978
        %s980 = sand.u32 %s171, 1
        %s981 = smul.addr %s980, 8
        %s982 = scalar_lea.vmem [#allocation3], %s981
        // Predicated region
        $region41: #{tpu_custom_call.1} parent=39 // pred_check
          %p983 = pneg %p181
        $region42: #{tpu_custom_call.1} parent=39 // pred_check_branch
          %985 = sbr.rel (%p983) target = $region44
        $region43: #{tpu_custom_call.1} parent=39 // pred_region
          %s986 = smul.u32 2, %s25
          %988 = vsyncadd %s979, 0
          %s989 = smul.addr %s24, 2
          %s990 = sadd.s32 %s986, %s989
          %s991 = smul.addr %s990, 4
          %s992 = scalar_lea.hbm %s5, %s991
          %s994 = sshll.u32 %s982, 4
          %s995 = int_to_ptr.vmem [resolvable:$true] %s994
          %s996 = sshll.u32 %s992, 4
          %s997 = int_to_ptr.hbm [resolvable:$true] %s996
          %999 = dma.vmem_to_hbm [thread:$0]  %s995, 128, %s997, %s979
        $region44: #{tpu_custom_call.1} parent=39 // pred_fallthru
          _
      $region40: #{tpu_custom_call.1} parent=5 // pred_fallthru
        _
      %p1000 = scmp.le.s32.totalorder 2, %s15
      // Predicated region
      $region45: #{tpu_custom_call.1} parent=5 // pred_check
        %p1001 = pneg %p1000
      $region46: #{tpu_custom_call.1} parent=5 // pred_check_branch
        %1003 = sbr.rel (%p1001) target = $region48
      $region47: #{tpu_custom_call.1} parent=5 // pred_region
        %s1004 = ssub.s32 %s15, 2
        // Predicated region
        $region49: #{tpu_custom_call.1} parent=47 // pred_check
          %p1005 = pneg %p187
        $region50: #{tpu_custom_call.1} parent=47 // pred_check_branch
          %1007 = sbr.rel (%p1005) target = $region52
        $region51: #{tpu_custom_call.1} parent=47 // pred_region
          %s1008 = sand.u32 %s172, 1
          %s1009 = scalar_lea.sflag [#allocation4], %s1008
          %s1010 = sand.u32 %s172, 1
          %s1011 = smul.addr %s1010, 8
          %s1012 = scalar_lea.vmem [#allocation3], %s1011
          %1014 = dma.done %s1009, 128
        $region52: #{tpu_custom_call.1} parent=47 // pred_fallthru
          _
      $region48: #{tpu_custom_call.1} parent=5 // pred_fallthru
        _
    $region6: #{tpu_custom_call.1} parent=1 // loop_footer
      %s19 = sadd.s32 1, %s15
    $region7: #{tpu_custom_call.1} parent=1 // loop_footer_branch
      %14 = sbr.rel target = $region3
    $region8: #{tpu_custom_call.1} parent=1 // loop_exit
      _
    %1015 = vsyncpa [#allocation4], 1
    %s1016 = scalar_lea.sflag [#allocation4], 1
    %1017 = vsyncpa %s1016, 1

</llo_original>
